<compile_context>
chip_gen: v7x
topology: tpu7x:2x2x1
jax: 0.10.0
libtpu: 0.0.40
codegen_flags: <defaults>
</compile_context>

<pallas_src>
import jax
import jax.numpy as jnp
from jax.experimental import pallas as pl
from jax.experimental.pallas import tpu as pltpu


IN_DIM, HID1, HID2, OUT_DIM = 4, 128, 32, 3
OUT_PAD = 8  # output rows padded 3 -> 8 for full-sublane, unmasked stores


def _round_up(x, m):
    return ((x + m - 1) // m) * m


def mlp_kernel(x_ref, w1_ref, b1_ref, w2_ref, b2_ref, w3_ref, b3_ref, o_ref):
    # Per grid step:
    #   x_ref: (4, TB)     w1: (128, 4)   b1: (128, 1)
    #   w2:    (32, 128)   b2: (32, 1)
    #   w3:    (8, 32)     b3: (8, 1)     o_ref: (8, TB)
    x = x_ref[...]

    # Layer 1 on the MXU.  K=4 utilization of the systolic array is poor but
    # irrelevant: cost is bounded by result-vreg pops, and the MXU is
    # otherwise idle here, while the VPU is the saturating slot.
    h1 = jnp.dot(w1_ref[...], x, preferred_element_type=jnp.float32)   # (128, TB)
    h1 = jnp.maximum(h1 + b1_ref[...], 0.0)

    # Layer 2: (32,128) @ (128,TB) — the one well-shaped GEMM.
    h2 = jnp.dot(w2_ref[...], h1, preferred_element_type=jnp.float32)  # (32, TB)
    h2 = jnp.maximum(h2 + b2_ref[...], 0.0)

    # Layer 3: (8,32) @ (32,TB); rows 3..7 of w3/b3 are zero-padded.
    out = jnp.dot(w3_ref[...], h2, preferred_element_type=jnp.float32)  # (8, TB)
    o_ref[...] = (out + b3_ref[...]).astype(o_ref.dtype)


def _choose_tile(B, block_batch):
    """Pick the batch tile (lane axis).  Multiple of 128; large enough to
    amortize per-step overhead; capped so the grid has >= 2 steps whenever
    the batch allows it (keeps both v7x TensorCores busy)."""
    B128 = _round_up(max(B, 1), 128)
    if B128 >= 256:
        half = _round_up((B128 + 1) // 2, 128)
        TB = min(block_batch, half)
    else:
        TB = B128
    B_pad = _round_up(B128, TB)
    return TB, B_pad


def _prepare_params(params):
    """Pad the output layer from 3 to 8 rows (zeros).  Done once, wrapper-side."""
    w3p = jnp.pad(params["w3"], ((0, OUT_PAD - OUT_DIM), (0, 0)))
    b3p = jnp.pad(params["b3"], ((0, OUT_PAD - OUT_DIM), (0, 0)))
    return (params["w1"], params["b1"], params["w2"], params["b2"], w3p, b3p)


def _mlp_pallas(x_cm, w1, b1, w2, b2, w3p, b3p, TB):
    """x_cm: (4, B_pad) channel-major, B_pad a multiple of TB. Returns (8, B_pad)."""
    B_pad = x_cm.shape[1]
    grid = (B_pad // TB,)

    def resident(a):
        return pl.BlockSpec(a.shape, lambda i: (0, 0))

    flops = 2 * B_pad * (IN_DIM * HID1 + HID1 * HID2 + HID2 * OUT_PAD)
    weight_bytes = 4 * sum(int(a.size) for a in (w1, b1, w2, b2, w3p, b3p))
    bytes_accessed = 4 * B_pad * (IN_DIM + OUT_PAD) + weight_bytes

    return pl.pallas_call(
        mlp_kernel,
        out_shape=jax.ShapeDtypeStruct((OUT_PAD, B_pad), x_cm.dtype),
        grid_spec=pltpu.PrefetchScalarGridSpec(
            num_scalar_prefetch=0,
            grid=grid,
            in_specs=[
                pl.BlockSpec((IN_DIM, TB), lambda i: (0, i)),      # x tile
                resident(w1), resident(b1),                        # VMEM-resident
                resident(w2), resident(b2),
                resident(w3p), resident(b3p),
            ],
            out_specs=pl.BlockSpec((OUT_PAD, TB), lambda i: (0, i)),
        ),
        compiler_params=pltpu.CompilerParams(
            # Batch tiles are independent -> shard across both TCs on v7x.
            dimension_semantics=("parallel",),
        ),
        cost_estimate=pl.CostEstimate(
            flops=flops, transcendentals=0, bytes_accessed=bytes_accessed),
    )(x_cm, w1, b1, w2, b2, w3p, b3p)


def mlp_forward_cm(x_cm, params, *, block_batch=8192):
    """Channel-major entry point: x_cm is (4, B) float32 -> (3, B) float32.
    Skips the (B,4)<->(4,B) relayouts for callers already in this layout."""
    assert block_batch % 128 == 0, "tile lane-width must be a multiple of 128"
    B = x_cm.shape[1]
    TB, B_pad = _choose_tile(B, block_batch)
    if B_pad != B:
        x_cm = jnp.pad(x_cm, ((0, 0), (0, B_pad - B)))
    w1, b1, w2, b2, w3p, b3p = _prepare_params(params)
    out = _mlp_pallas(x_cm, w1, b1, w2, b2, w3p, b3p, TB)          # (8, B_pad)
    return out[:OUT_DIM, :B]                                       # (3, B)


def mlp_forward(x, params, *, block_batch=8192):
    """nn.Module-shaped contract: x (B, 4) float32 -> (B, 3) float32.
    The two transposes are wrapper-side plumbing; call mlp_forward_cm (or run
    this inside a larger jit) to avoid the standalone relayout dispatches."""
    return mlp_forward_cm(x.T, params, block_batch=block_batch).T


def init_params(key):
    """Deterministic init mirroring PyTorch nn.Linear defaults
    (uniform(-1/sqrt(fan_in), 1/sqrt(fan_in))).  Weights kept in PyTorch's
    (out_features, in_features) layout; biases stored as (out_features, 1)."""
    dims = [(IN_DIM, HID1), (HID1, HID2), (HID2, OUT_DIM)]
    params = {}
    for idx, (fan_in, fan_out) in enumerate(dims, start=1):
        key, kw, kb = jax.random.split(key, 3)
        bound = 1.0 / jnp.sqrt(fan_in)
        params[f"w{idx}"] = jax.random.uniform(
            kw, (fan_out, fan_in), jnp.float32, -bound, bound)
        params[f"b{idx}"] = jax.random.uniform(
            kb, (fan_out, 1), jnp.float32, -bound, bound)
    return params


def mlp_reference(x, params):
    h = jnp.maximum(x @ params["w1"].T + params["b1"][:, 0], 0.0)
    h = jnp.maximum(h @ params["w2"].T + params["b2"][:, 0], 0.0)
    return h @ params["w3"].T + params["b3"][:, 0]


if __name__ == "__main__":
    key = jax.random.PRNGKey(0)
    kp, kx = jax.random.split(key)
    params = init_params(kp)

    batch = 8
    x = jax.random.normal(kx, (batch, IN_DIM), dtype=jnp.float32)

    out = mlp_forward(x, params)
    out = jax.block_until_ready(out)

    ref = mlp_reference(x, params)
    assert out.shape == (batch, OUT_DIM)
    assert jnp.allclose(out, ref, atol=1e-5, rtol=1e-5), "mismatch vs reference"

    print("KERNEL_OK")
</pallas_src>

<mosaic_0001>
module attributes {stable_mosaic.version = 11 : i64} {
  func.func @mlp_kernel(%arg0: i32, %arg1: memref<4x128xf32, #tpu.memory_space<vmem>>, %arg2: memref<128x4xf32, #tpu.memory_space<vmem>>, %arg3: memref<128x1xf32, #tpu.memory_space<vmem>>, %arg4: memref<32x128xf32, #tpu.memory_space<vmem>>, %arg5: memref<32x1xf32, #tpu.memory_space<vmem>>, %arg6: memref<8x32xf32, #tpu.memory_space<vmem>>, %arg7: memref<8x1xf32, #tpu.memory_space<vmem>>, %arg8: memref<8x128xf32, #tpu.memory_space<vmem>>) attributes {dimension_semantics = [#tpu.dimension_semantics<parallel>], iteration_bounds = array<i64: 1>, scalar_prefetch = 0 : i64, scratch_operands = 0 : i64, tpu.core_type = #tpu.core_type<tc>, window_params = [{transform_indices = @transform_0, window_bounds = array<i64: 4, 128>}, {pipeline_mode = #tpu.pipeline_mode<synchronous>, transform_indices = @transform_1, window_bounds = array<i64: 128, 4>}, {pipeline_mode = #tpu.pipeline_mode<synchronous>, transform_indices = @transform_2, window_bounds = array<i64: 128, 1>}, {pipeline_mode = #tpu.pipeline_mode<synchronous>, transform_indices = @transform_3, window_bounds = array<i64: 32, 128>}, {pipeline_mode = #tpu.pipeline_mode<synchronous>, transform_indices = @transform_4, window_bounds = array<i64: 32, 1>}, {pipeline_mode = #tpu.pipeline_mode<synchronous>, transform_indices = @transform_5, window_bounds = array<i64: 8, 32>}, {pipeline_mode = #tpu.pipeline_mode<synchronous>, transform_indices = @transform_6, window_bounds = array<i64: 8, 1>}, {transform_indices = @transform_7, window_bounds = array<i64: 8, 128>}]} {
    %c0 = arith.constant 0 : index
    %c0_0 = arith.constant 0 : index
    %0 = vector.load %arg1[%c0, %c0_0] : memref<4x128xf32, #tpu.memory_space<vmem>>, vector<4x128xf32>
    %c0_1 = arith.constant 0 : index
    %c0_2 = arith.constant 0 : index
    %1 = vector.load %arg2[%c0_1, %c0_2] : memref<128x4xf32, #tpu.memory_space<vmem>>, vector<128x4xf32>
    %cst = arith.constant dense<0.000000e+00> : vector<128x128xf32>
    %2 = tpu.matmul %1, %0, %cst {dimension_numbers = #tpu.dot_dimension_numbers<[1], [0], [0], [1], [0, 0, 1, 1], [], []>} : vector<128x4xf32>, vector<4x128xf32>, vector<128x128xf32> -> vector<128x128xf32>
    %c0_3 = arith.constant 0 : index
    %c0_4 = arith.constant 0 : index
    %3 = vector.load %arg3[%c0_3, %c0_4] : memref<128x1xf32, #tpu.memory_space<vmem>>, vector<128x1xf32>
    %4 = vector.broadcast %3 : vector<128x1xf32> to vector<128x128xf32>
    %5 = arith.addf %2, %4 : vector<128x128xf32>
    %cst_5 = arith.constant 0.000000e+00 : f32
    %6 = vector.broadcast %cst_5 : f32 to vector<128x128xf32>
    %7 = arith.maximumf %5, %6 : vector<128x128xf32>
    %c0_6 = arith.constant 0 : index
    %c0_7 = arith.constant 0 : index
    %8 = vector.load %arg4[%c0_6, %c0_7] : memref<32x128xf32, #tpu.memory_space<vmem>>, vector<32x128xf32>
    %cst_8 = arith.constant dense<0.000000e+00> : vector<32x128xf32>
    %9 = tpu.matmul %8, %7, %cst_8 {dimension_numbers = #tpu.dot_dimension_numbers<[1], [0], [0], [1], [0, 0, 1, 1], [], []>} : vector<32x128xf32>, vector<128x128xf32>, vector<32x128xf32> -> vector<32x128xf32>
    %c0_9 = arith.constant 0 : index
    %c0_10 = arith.constant 0 : index
    %10 = vector.load %arg5[%c0_9, %c0_10] : memref<32x1xf32, #tpu.memory_space<vmem>>, vector<32x1xf32>
    %11 = vector.broadcast %10 : vector<32x1xf32> to vector<32x128xf32>
    %12 = arith.addf %9, %11 : vector<32x128xf32>
    %cst_11 = arith.constant 0.000000e+00 : f32
    %13 = vector.broadcast %cst_11 : f32 to vector<32x128xf32>
    %14 = arith.maximumf %12, %13 : vector<32x128xf32>
    %c0_12 = arith.constant 0 : index
    %c0_13 = arith.constant 0 : index
    %15 = vector.load %arg6[%c0_12, %c0_13] : memref<8x32xf32, #tpu.memory_space<vmem>>, vector<8x32xf32>
    %cst_14 = arith.constant dense<0.000000e+00> : vector<8x128xf32>
    %16 = tpu.matmul %15, %14, %cst_14 {dimension_numbers = #tpu.dot_dimension_numbers<[1], [0], [0], [1], [0, 0, 1, 1], [], []>} : vector<8x32xf32>, vector<32x128xf32>, vector<8x128xf32> -> vector<8x128xf32>
    %c0_15 = arith.constant 0 : index
    %c0_16 = arith.constant 0 : index
    %17 = vector.load %arg7[%c0_15, %c0_16] : memref<8x1xf32, #tpu.memory_space<vmem>>, vector<8x1xf32>
    %18 = vector.broadcast %17 : vector<8x1xf32> to vector<8x128xf32>
    %19 = arith.addf %16, %18 : vector<8x128xf32>
    %c0_17 = arith.constant 0 : index
    %c0_18 = arith.constant 0 : index
    %20 = vector.load %arg8[%c0_17, %c0_18] : memref<8x128xf32, #tpu.memory_space<vmem>>, vector<8x128xf32>
    tpu.vector_store %arg8[%c0_17, %c0_18], %19 {strides = array<i32>} : memref<8x128xf32, #tpu.memory_space<vmem>>, vector<8x128xf32>,
    return
  }
  func.func @transform_0(%arg0: i32) -> (i32, i32) {
    %c0_i32 = arith.constant 0 : i32
    %c0_i32_0 = arith.constant 0 : i32
    return %c0_i32, %arg0 : i32, i32
  }
  func.func @transform_1(%arg0: i32) -> (i32, i32) {
    %c0_i32 = arith.constant 0 : i32
    %c0_i32_0 = arith.constant 0 : i32
    %c0_i32_1 = arith.constant 0 : i32
    return %c0_i32, %c0_i32_0 : i32, i32
  }
  func.func @transform_2(%arg0: i32) -> (i32, i32) {
    %c0_i32 = arith.constant 0 : i32
    %c0_i32_0 = arith.constant 0 : i32
    %c0_i32_1 = arith.constant 0 : i32
    return %c0_i32, %c0_i32_0 : i32, i32
  }
  func.func @transform_3(%arg0: i32) -> (i32, i32) {
    %c0_i32 = arith.constant 0 : i32
    %c0_i32_0 = arith.constant 0 : i32
    %c0_i32_1 = arith.constant 0 : i32
    return %c0_i32, %c0_i32_0 : i32, i32
  }
  func.func @transform_4(%arg0: i32) -> (i32, i32) {
    %c0_i32 = arith.constant 0 : i32
    %c0_i32_0 = arith.constant 0 : i32
    %c0_i32_1 = arith.constant 0 : i32
    return %c0_i32, %c0_i32_0 : i32, i32
  }
  func.func @transform_5(%arg0: i32) -> (i32, i32) {
    %c0_i32 = arith.constant 0 : i32
    %c0_i32_0 = arith.constant 0 : i32
    %c0_i32_1 = arith.constant 0 : i32
    return %c0_i32, %c0_i32_0 : i32, i32
  }
  func.func @transform_6(%arg0: i32) -> (i32, i32) {
    %c0_i32 = arith.constant 0 : i32
    %c0_i32_0 = arith.constant 0 : i32
    %c0_i32_1 = arith.constant 0 : i32
    return %c0_i32, %c0_i32_0 : i32, i32
  }
  func.func @transform_7(%arg0: i32) -> (i32, i32) {
    %c0_i32 = arith.constant 0 : i32
    %c0_i32_0 = arith.constant 0 : i32
    return %c0_i32, %arg0 : i32, i32
  }
}

</mosaic_0001>

<llo_original>
// kernel: tpu_custom_call.1
$region0: #{tpu_custom_call.1}
  #allocation0 [shape = 'u32[]', space=smem, size = 0x4, offset = 0x4, fixed_abs, tag = 'smem constant byte address 0x4 - core index']
  #allocation1 [shape = 'u32[144,128]{1,0:T(1,128)}', space=vmem, size = 0x12000, scoped, tag = 'internal scratch']
  %s0 = inlined_call_operand.vmem [shape: f32[4,128], index: 0, kind: input, shape index: {}]
  %s1 = inlined_call_operand.vmem [shape: f32[128,4], index: 1, kind: input, shape index: {}]
  %s2 = inlined_call_operand.vmem [shape: f32[128,1], index: 2, kind: input, shape index: {}]
  %s3 = inlined_call_operand.vmem [shape: f32[32,128], index: 3, kind: input, shape index: {}]
  %s4 = inlined_call_operand.vmem [shape: f32[32,1], index: 4, kind: input, shape index: {}]
  %s5 = inlined_call_operand.vmem [shape: f32[8,32], index: 5, kind: input, shape index: {}]
  %s6 = inlined_call_operand.vmem [shape: f32[8,1], index: 6, kind: input, shape index: {}]
  %s7 = inlined_call_operand.hbm [shape: f32[8,128], index: 7, kind: output, shape index: {}]
  %s8 = sld [smem:[#allocation0]]
  $region38: #{tpu_custom_call.1} parent=0
    _
  %s10 = ssub.s32 1, %s8
  %s11 = scalar_select 0, %s10, %s8
  $region1: #{tpu_custom_call.1} parent=0
    #allocation2 [shape = 'u8[4096]{0}', space=vmem, size = 0x1000, scoped, tag = 'output window, operand 0, single buffered']
    #allocation3 [shape = 's32[1]{0}', space=sflag, size = 0x4, scoped, tag = 'scoped memory for tpu_custom_call.1']
    %12 = vsyncpa [#allocation3], 0
    // Predicated region
    $region2: #{tpu_custom_call.1} parent=1 // pred_check
      _
    $region3: #{tpu_custom_call.1} parent=1 // pred_check_branch
      %14 = sbr.rel (0) target = $region5
    $region4: #{tpu_custom_call.1} parent=1 // pred_region
      _
    $region5: #{tpu_custom_call.1} parent=1 // pred_fallthru
      _
    // Predicated region
    $region6: #{tpu_custom_call.1} parent=1 // pred_check
      _
    $region7: #{tpu_custom_call.1} parent=1 // pred_check_branch
      %16 = sbr.rel (0) target = $region9
    $region8: #{tpu_custom_call.1} parent=1 // pred_region
      _
    $region9: #{tpu_custom_call.1} parent=1 // pred_fallthru
      _
    // Predicated region
    $region10: #{tpu_custom_call.1} parent=1 // pred_check
      _
    $region11: #{tpu_custom_call.1} parent=1 // pred_check_branch
      %18 = sbr.rel (0) target = $region13
    $region12: #{tpu_custom_call.1} parent=1 // pred_region
      _
    $region13: #{tpu_custom_call.1} parent=1 // pred_fallthru
      _
    // Predicated region
    $region14: #{tpu_custom_call.1} parent=1 // pred_check
      _
    $region15: #{tpu_custom_call.1} parent=1 // pred_check_branch
      %20 = sbr.rel (0) target = $region17
    $region16: #{tpu_custom_call.1} parent=1 // pred_region
      _
    $region17: #{tpu_custom_call.1} parent=1 // pred_fallthru
      _
    // Predicated region
    $region18: #{tpu_custom_call.1} parent=1 // pred_check
      _
    $region19: #{tpu_custom_call.1} parent=1 // pred_check_branch
      %22 = sbr.rel (0) target = $region21
    $region20: #{tpu_custom_call.1} parent=1 // pred_region
      _
    $region21: #{tpu_custom_call.1} parent=1 // pred_fallthru
      _
    // Predicated region
    $region22: #{tpu_custom_call.1} parent=1 // pred_check
      _
    $region23: #{tpu_custom_call.1} parent=1 // pred_check_branch
      %24 = sbr.rel (0) target = $region25
    $region24: #{tpu_custom_call.1} parent=1 // pred_region
      _
    $region25: #{tpu_custom_call.1} parent=1 // pred_fallthru
      _
    // Predicated region
    $region26: #{tpu_custom_call.1} parent=1 // pred_check
      _
    $region27: #{tpu_custom_call.1} parent=1 // pred_check_branch
      %26 = sbr.rel (0) target = $region29
    $region28: #{tpu_custom_call.1} parent=1 // pred_region
      _
    $region29: #{tpu_custom_call.1} parent=1 // pred_fallthru
      _
    %v27 = vld [vmem:[%s0] sm:$0xf]
    %v28 = vld [vmem:[%s1] sm:$0xff]
    %v29 = vld [vmem:[%s1 + $0x8] sm:$0xff]
    %v30 = vld [vmem:[%s1 + $0x10] sm:$0xff]
    %v31 = vld [vmem:[%s1 + $0x18] sm:$0xff]
    %v32 = vld [vmem:[%s1 + $0x20] sm:$0xff]
    %v33 = vld [vmem:[%s1 + $0x28] sm:$0xff]
    %v34 = vld [vmem:[%s1 + $0x30] sm:$0xff]
    %v35 = vld [vmem:[%s1 + $0x38] sm:$0xff]
    %v36 = vld [vmem:[%s1 + $0x40] sm:$0xff]
    %v37 = vld [vmem:[%s1 + $0x48] sm:$0xff]
    %v38 = vld [vmem:[%s1 + $0x50] sm:$0xff]
    %v39 = vld [vmem:[%s1 + $0x58] sm:$0xff]
    %v40 = vld [vmem:[%s1 + $0x60] sm:$0xff]
    %v41 = vld [vmem:[%s1 + $0x68] sm:$0xff]
    %v42 = vld [vmem:[%s1 + $0x70] sm:$0xff]
    %v43 = vld [vmem:[%s1 + $0x78] sm:$0xff]
    %v44 = vld [vmem:[%s2] sm:$0xff]
    %v45 = vld [vmem:[%s2 + $0x8] sm:$0xff]
    %v46 = vld [vmem:[%s2 + $0x10] sm:$0xff]
    %v47 = vld [vmem:[%s2 + $0x18] sm:$0xff]
    %v48 = vld [vmem:[%s2 + $0x20] sm:$0xff]
    %v49 = vld [vmem:[%s2 + $0x28] sm:$0xff]
    %v50 = vld [vmem:[%s2 + $0x30] sm:$0xff]
    %v51 = vld [vmem:[%s2 + $0x38] sm:$0xff]
    %v52 = vld [vmem:[%s2 + $0x40] sm:$0xff]
    %v53 = vld [vmem:[%s2 + $0x48] sm:$0xff]
    %v54 = vld [vmem:[%s2 + $0x50] sm:$0xff]
    %v55 = vld [vmem:[%s2 + $0x58] sm:$0xff]
    %v56 = vld [vmem:[%s2 + $0x60] sm:$0xff]
    %v57 = vld [vmem:[%s2 + $0x68] sm:$0xff]
    %v58 = vld [vmem:[%s2 + $0x70] sm:$0xff]
    %v59 = vld [vmem:[%s2 + $0x78] sm:$0xff]
    %61 = vset.pattern.permute.xlu0 0
    %62 = vperm.xlu0 %61, %v44
    %v63 = vpop.permute.xlu0 %62
    %66 = vset.pattern.permute.xlu0 0
    %67 = vperm.xlu0 %66, %v45
    %v68 = vpop.permute.xlu0 %67
    %71 = vset.pattern.permute.xlu0 0
    %72 = vperm.xlu0 %71, %v46
    %v73 = vpop.permute.xlu0 %72
    %76 = vset.pattern.permute.xlu0 0
    %77 = vperm.xlu0 %76, %v47
    %v78 = vpop.permute.xlu0 %77
    %81 = vset.pattern.permute.xlu0 0
    %82 = vperm.xlu0 %81, %v48
    %v83 = vpop.permute.xlu0 %82
    %86 = vset.pattern.permute.xlu0 0
    %87 = vperm.xlu0 %86, %v49
    %v88 = vpop.permute.xlu0 %87
    %91 = vset.pattern.permute.xlu0 0
    %92 = vperm.xlu0 %91, %v50
    %v93 = vpop.permute.xlu0 %92
    %96 = vset.pattern.permute.xlu0 0
    %97 = vperm.xlu0 %96, %v51
    %v98 = vpop.permute.xlu0 %97
    %101 = vset.pattern.permute.xlu0 0
    %102 = vperm.xlu0 %101, %v52
    %v103 = vpop.permute.xlu0 %102
    %106 = vset.pattern.permute.xlu0 0
    %107 = vperm.xlu0 %106, %v53
    %v108 = vpop.permute.xlu0 %107
    %111 = vset.pattern.permute.xlu0 0
    %112 = vperm.xlu0 %111, %v54
    %v113 = vpop.permute.xlu0 %112
    %116 = vset.pattern.permute.xlu0 0
    %117 = vperm.xlu0 %116, %v55
    %v118 = vpop.permute.xlu0 %117
    %121 = vset.pattern.permute.xlu0 0
    %122 = vperm.xlu0 %121, %v56
    %v123 = vpop.permute.xlu0 %122
    %126 = vset.pattern.permute.xlu0 0
    %127 = vperm.xlu0 %126, %v57
    %v128 = vpop.permute.xlu0 %127
    %131 = vset.pattern.permute.xlu0 0
    %132 = vperm.xlu0 %131, %v58
    %v133 = vpop.permute.xlu0 %132
    %136 = vset.pattern.permute.xlu0 0
    %137 = vperm.xlu0 %136, %v59
    %v138 = vpop.permute.xlu0 %137
    %vm140 = vcmask 31744
    %v142 = vsel %vm140, %v28, 0
    %v145 = vsel %vm140, %v29, 0
    %v148 = vsel %vm140, %v30, 0
    %v151 = vsel %vm140, %v31, 0
    %v154 = vsel %vm140, %v32, 0
    %v157 = vsel %vm140, %v33, 0
    %v160 = vsel %vm140, %v34, 0
    %v163 = vsel %vm140, %v35, 0
    %v166 = vsel %vm140, %v36, 0
    %v169 = vsel %vm140, %v37, 0
    %v172 = vsel %vm140, %v38, 0
    %v175 = vsel %vm140, %v39, 0
    %v178 = vsel %vm140, %v40, 0
    %v181 = vsel %vm140, %v41, 0
    %v184 = vsel %vm140, %v42, 0
    %v187 = vsel %vm140, %v43, 0
    %vm189 = vcmask 1043456
    %v191 = vsel %vm189, %v27, 0
    %193 = vmatprep.subr.mxu0 0.0
    %194 = vmatpush1.msra.mxu0 %v191
    %195 = vmatprep.subr.mxu0 0.0
    %196 = vmatpush1.msra.mxu0 0.0
    %197 = vmatprep.subr.mxu0 0.0
    %198 = vmatpush1.msra.mxu0 0.0
    %199 = vmatprep.subr.mxu0 0.0
    %200 = vmatpush1.msra.mxu0 0.0
    %201 = vmatprep.subr.mxu0 0.0
    %202 = vmatpush1.msra.mxu0 0.0
    %203 = vmatprep.subr.mxu0 0.0
    %204 = vmatpush1.msra.mxu0 0.0
    %205 = vmatprep.subr.mxu0 0.0
    %206 = vmatpush1.msra.mxu0 0.0
    %207 = vmatprep.subr.mxu0 0.0
    %208 = vmatpush1.msra.mxu0 0.0
    %209 = vmatprep.subr.mxu0 0.0
    %210 = vmatpush1.msra.mxu0 0.0
    %211 = vmatprep.subr.mxu0 0.0
    %212 = vmatpush1.msra.mxu0 0.0
    %213 = vmatprep.subr.mxu0 0.0
    %214 = vmatpush1.msra.mxu0 0.0
    %215 = vmatprep.subr.mxu0 0.0
    %216 = vmatpush1.msra.mxu0 0.0
    %217 = vmatprep.subr.mxu0 0.0
    %218 = vmatpush1.msra.mxu0 0.0
    %219 = vmatprep.subr.mxu0 0.0
    %220 = vmatpush1.msra.mxu0 0.0
    %221 = vmatprep.subr.mxu0 0.0
    %222 = vmatpush1.msra.mxu0 0.0
    %223 = vmatprep.subr.mxu0 0.0
    %224 = vmatpush1.msra.mxu0 0.0
    %225 = vmatprep.subr.mxu0 0.0
    %226 = vmatpush1.msra.mxu0 0.0
    %227 = vmatprep.subr.mxu0 0.0
    %228 = vmatpush1.msra.mxu0 0.0
    %229 = vmatprep.subr.mxu0 0.0
    %230 = vmatpush1.msra.mxu0 0.0
    %231 = vmatprep.subr.mxu0 0.0
    %232 = vmatpush1.msra.mxu0 0.0
    %233 = vmatprep.subr.mxu0 0.0
    %234 = vmatpush1.msra.mxu0 0.0
    %235 = vmatprep.subr.mxu0 0.0
    %236 = vmatpush1.msra.mxu0 0.0
    %237 = vmatprep.subr.mxu0 0.0
    %238 = vmatpush1.msra.mxu0 0.0
    %239 = vmatprep.subr.mxu0 0.0
    %240 = vmatpush1.msra.mxu0 0.0
    %241 = vmatprep.subr.mxu0 0.0
    %242 = vmatpush1.msra.mxu0 0.0
    %243 = vmatprep.subr.mxu0 0.0
    %244 = vmatpush1.msra.mxu0 0.0
    %245 = vmatprep.subr.mxu0 0.0
    %246 = vmatpush1.msra.mxu0 0.0
    %247 = vmatprep.subr.mxu0 0.0
    %248 = vmatpush1.msra.mxu0 0.0
    %249 = vmatprep.subr.mxu0 0.0
    %250 = vmatpush1.msra.mxu0 0.0
    %251 = vmatprep.subr.mxu0 0.0
    %252 = vmatpush1.msra.mxu0 0.0
    %253 = vmatprep.subr.mxu0 0.0
    %254 = vmatpush1.msra.mxu0 0.0
    %255 = vmatprep.subr.mxu0 0.0
    %256 = vmatpush1.msra.mxu0 0.0
    %257 = vmatprep.mubr.f32.mxu0 0.0
    %258 = vmatmul.mubr.f32.gmra.mrb[0].mxu0 %v142
    %v259 = vpop.f32.mrb[0].mxu0
    %v260 = vadd.f32 %v63, %v259
    %v261 = vpop.f32.mrb[0].mxu0
    %262 = vmatprep.mubr.f32.mxu0 0.0
    %263 = vmatmul.mubr.f32.gmra.mrb[0].mxu0 %v145
    %v264 = vpop.f32.mrb[0].mxu0
    %v265 = vadd.f32 %v68, %v264
    %v266 = vpop.f32.mrb[0].mxu0
    %267 = vmatprep.mubr.f32.mxu0 0.0
    %268 = vmatmul.mubr.f32.gmra.mrb[0].mxu0 %v148
    %v269 = vpop.f32.mrb[0].mxu0
    %v270 = vadd.f32 %v73, %v269
    %v271 = vpop.f32.mrb[0].mxu0
    %272 = vmatprep.mubr.f32.mxu0 0.0
    %273 = vmatmul.mubr.f32.gmra.mrb[0].mxu0 %v151
    %v274 = vpop.f32.mrb[0].mxu0
    %v275 = vadd.f32 %v78, %v274
    %v276 = vpop.f32.mrb[0].mxu0
    %277 = vmatprep.mubr.f32.mxu0 0.0
    %278 = vmatmul.mubr.f32.gmra.mrb[0].mxu0 %v154
    %v279 = vpop.f32.mrb[0].mxu0
    %v280 = vadd.f32 %v83, %v279
    %v281 = vpop.f32.mrb[0].mxu0
    %282 = vmatprep.mubr.f32.mxu0 0.0
    %283 = vmatmul.mubr.f32.gmra.mrb[0].mxu0 %v157
    %v284 = vpop.f32.mrb[0].mxu0
    %v285 = vadd.f32 %v88, %v284
    %v286 = vpop.f32.mrb[0].mxu0
    %287 = vmatprep.mubr.f32.mxu0 0.0
    %288 = vmatmul.mubr.f32.gmra.mrb[0].mxu0 %v160
    %v289 = vpop.f32.mrb[0].mxu0
    %v290 = vadd.f32 %v93, %v289
    %v291 = vpop.f32.mrb[0].mxu0
    %292 = vmatprep.mubr.f32.mxu0 0.0
    %293 = vmatmul.mubr.f32.gmra.mrb[0].mxu0 %v163
    %v294 = vpop.f32.mrb[0].mxu0
    %v295 = vadd.f32 %v98, %v294
    %v296 = vpop.f32.mrb[0].mxu0
    %297 = vmatprep.mubr.f32.mxu0 0.0
    %298 = vmatmul.mubr.f32.gmra.mrb[0].mxu0 %v166
    %v299 = vpop.f32.mrb[0].mxu0
    %v300 = vadd.f32 %v103, %v299
    %v301 = vpop.f32.mrb[0].mxu0
    %302 = vmatprep.mubr.f32.mxu0 0.0
    %303 = vmatmul.mubr.f32.gmra.mrb[0].mxu0 %v169
    %v304 = vpop.f32.mrb[0].mxu0
    %v305 = vadd.f32 %v108, %v304
    %v306 = vpop.f32.mrb[0].mxu0
    %307 = vmatprep.mubr.f32.mxu0 0.0
    %308 = vmatmul.mubr.f32.gmra.mrb[0].mxu0 %v172
    %v309 = vpop.f32.mrb[0].mxu0
    %v310 = vadd.f32 %v113, %v309
    %v311 = vpop.f32.mrb[0].mxu0
    %312 = vmatprep.mubr.f32.mxu0 0.0
    %313 = vmatmul.mubr.f32.gmra.mrb[0].mxu0 %v175
    %v314 = vpop.f32.mrb[0].mxu0
    %v315 = vadd.f32 %v118, %v314
    %v316 = vpop.f32.mrb[0].mxu0
    %317 = vmatprep.mubr.f32.mxu0 0.0
    %318 = vmatmul.mubr.f32.gmra.mrb[0].mxu0 %v178
    %v319 = vpop.f32.mrb[0].mxu0
    %v320 = vadd.f32 %v123, %v319
    %v321 = vpop.f32.mrb[0].mxu0
    %322 = vmatprep.mubr.f32.mxu0 0.0
    %323 = vmatmul.mubr.f32.gmra.mrb[0].mxu0 %v181
    %v324 = vpop.f32.mrb[0].mxu0
    %v325 = vadd.f32 %v128, %v324
    %v326 = vpop.f32.mrb[0].mxu0
    %327 = vmatprep.mubr.f32.mxu0 0.0
    %328 = vmatmul.mubr.f32.gmra.mrb[0].mxu0 %v184
    %v329 = vpop.f32.mrb[0].mxu0
    %v330 = vadd.f32 %v133, %v329
    %v331 = vpop.f32.mrb[0].mxu0
    %332 = vmatprep.mubr.f32.mxu0 0.0
    %333 = vmatmul.mubr.f32.gmra.mrb[0].mxu0 %v187
    %v334 = vpop.f32.mrb[0].mxu0
    %v335 = vadd.f32 %v138, %v334
    %v336 = vpop.f32.mrb[0].mxu0
    %337 = vdwg.mxu0
    %v338 = vmax.f32 %v260, 0.0
    %v339 = vmax.f32 %v265, 0.0
    %v340 = vmax.f32 %v270, 0.0
    %v341 = vmax.f32 %v275, 0.0
    %v342 = vmax.f32 %v280, 0.0
    %v343 = vmax.f32 %v285, 0.0
    %v344 = vmax.f32 %v290, 0.0
    %v345 = vmax.f32 %v295, 0.0
    %v346 = vmax.f32 %v300, 0.0
    %v347 = vmax.f32 %v305, 0.0
    %v348 = vmax.f32 %v310, 0.0
    %v349 = vmax.f32 %v315, 0.0
    %v350 = vmax.f32 %v320, 0.0
    %v351 = vmax.f32 %v325, 0.0
    %v352 = vmax.f32 %v330, 0.0
    %v353 = vmax.f32 %v335, 0.0
    %v354 = vld [vmem:[%s3] sm:$0xff]
    %v355 = vld [vmem:[%s3 + $0x8] sm:$0xff]
    %v356 = vld [vmem:[%s3 + $0x10] sm:$0xff]
    %v357 = vld [vmem:[%s3 + $0x18] sm:$0xff]
    %v358 = vld [vmem:[%s4] sm:$0xff]
    %v359 = vld [vmem:[%s4 + $0x8] sm:$0xff]
    %v360 = vld [vmem:[%s4 + $0x10] sm:$0xff]
    %v361 = vld [vmem:[%s4 + $0x18] sm:$0xff]
    %363 = vset.pattern.permute.xlu0 0
    %364 = vperm.xlu0 %363, %v358
    %v365 = vpop.permute.xlu0 %364
    %368 = vset.pattern.permute.xlu0 0
    %369 = vperm.xlu0 %368, %v359
    %v370 = vpop.permute.xlu0 %369
    %373 = vset.pattern.permute.xlu0 0
    %374 = vperm.xlu0 %373, %v360
    %v375 = vpop.permute.xlu0 %374
    %378 = vset.pattern.permute.xlu0 0
    %379 = vperm.xlu0 %378, %v361
    %v380 = vpop.permute.xlu0 %379
    %382 = vmatprep.subr.mxu0 0.0
    %383 = vmatpush1.msra.mxu0 %v338
    %384 = vmatprep.subr.mxu0 0.0
    %385 = vmatpush1.msra.mxu0 %v339
    %386 = vmatprep.subr.mxu0 0.0
    %387 = vmatpush1.msra.mxu0 %v340
    %388 = vmatprep.subr.mxu0 0.0
    %389 = vmatpush1.msra.mxu0 %v341
    %390 = vmatprep.subr.mxu0 0.0
    %391 = vmatpush1.msra.mxu0 %v342
    %392 = vmatprep.subr.mxu0 0.0
    %393 = vmatpush1.msra.mxu0 %v343
    %394 = vmatprep.subr.mxu0 0.0
    %395 = vmatpush1.msra.mxu0 %v344
    %396 = vmatprep.subr.mxu0 0.0
    %397 = vmatpush1.msra.mxu0 %v345
    %398 = vmatprep.subr.mxu0 0.0
    %399 = vmatpush1.msra.mxu0 %v346
    %400 = vmatprep.subr.mxu0 0.0
    %401 = vmatpush1.msra.mxu0 %v347
    %402 = vmatprep.subr.mxu0 0.0
    %403 = vmatpush1.msra.mxu0 %v348
    %404 = vmatprep.subr.mxu0 0.0
    %405 = vmatpush1.msra.mxu0 %v349
    %406 = vmatprep.subr.mxu0 0.0
    %407 = vmatpush1.msra.mxu0 %v350
    %408 = vmatprep.subr.mxu0 0.0
    %409 = vmatpush1.msra.mxu0 %v351
    %410 = vmatprep.subr.mxu0 0.0
    %411 = vmatpush1.msra.mxu0 %v352
    %412 = vmatprep.subr.mxu0 0.0
    %413 = vmatpush1.msra.mxu0 %v353
    %414 = vmatprep.subr.mxu0 0.0
    %415 = vmatpush1.msra.mxu0 0.0
    %416 = vmatprep.subr.mxu0 0.0
    %417 = vmatpush1.msra.mxu0 0.0
    %418 = vmatprep.subr.mxu0 0.0
    %419 = vmatpush1.msra.mxu0 0.0
    %420 = vmatprep.subr.mxu0 0.0
    %421 = vmatpush1.msra.mxu0 0.0
    %422 = vmatprep.subr.mxu0 0.0
    %423 = vmatpush1.msra.mxu0 0.0
    %424 = vmatprep.subr.mxu0 0.0
    %425 = vmatpush1.msra.mxu0 0.0
    %426 = vmatprep.subr.mxu0 0.0
    %427 = vmatpush1.msra.mxu0 0.0
    %428 = vmatprep.subr.mxu0 0.0
    %429 = vmatpush1.msra.mxu0 0.0
    %430 = vmatprep.subr.mxu0 0.0
    %431 = vmatpush1.msra.mxu0 0.0
    %432 = vmatprep.subr.mxu0 0.0
    %433 = vmatpush1.msra.mxu0 0.0
    %434 = vmatprep.subr.mxu0 0.0
    %435 = vmatpush1.msra.mxu0 0.0
    %436 = vmatprep.subr.mxu0 0.0
    %437 = vmatpush1.msra.mxu0 0.0
    %438 = vmatprep.subr.mxu0 0.0
    %439 = vmatpush1.msra.mxu0 0.0
    %440 = vmatprep.subr.mxu0 0.0
    %441 = vmatpush1.msra.mxu0 0.0
    %442 = vmatprep.subr.mxu0 0.0
    %443 = vmatpush1.msra.mxu0 0.0
    %444 = vmatprep.subr.mxu0 0.0
    %445 = vmatpush1.msra.mxu0 0.0
    %446 = vmatprep.mubr.f32.mxu0 0.0
    %447 = vmatmul.mubr.f32.gmra.mrb[0].mxu0 %v354
    %v448 = vpop.f32.mrb[0].mxu0
    %v449 = vadd.f32 %v365, %v448
    %v450 = vpop.f32.mrb[0].mxu0
    %451 = vmatprep.mubr.f32.mxu0 0.0
    %452 = vmatmul.mubr.f32.gmra.mrb[0].mxu0 %v355
    %v453 = vpop.f32.mrb[0].mxu0
    %v454 = vadd.f32 %v370, %v453
    %v455 = vpop.f32.mrb[0].mxu0
    %456 = vmatprep.mubr.f32.mxu0 0.0
    %457 = vmatmul.mubr.f32.gmra.mrb[0].mxu0 %v356
    %v458 = vpop.f32.mrb[0].mxu0
    %v459 = vadd.f32 %v375, %v458
    %v460 = vpop.f32.mrb[0].mxu0
    %461 = vmatprep.mubr.f32.mxu0 0.0
    %462 = vmatmul.mubr.f32.gmra.mrb[0].mxu0 %v357
    %v463 = vpop.f32.mrb[0].mxu0
    %v464 = vadd.f32 %v380, %v463
    %v465 = vpop.f32.mrb[0].mxu0
    %466 = vdwg.mxu0
    %v467 = vmax.f32 %v449, 0.0
    %v468 = vmax.f32 %v454, 0.0
    %v469 = vmax.f32 %v459, 0.0
    %v470 = vmax.f32 %v464, 0.0
    %v471 = vld [vmem:[%s5] sm:$0xff]
    %v472 = vld [vmem:[%s6] sm:$0xff]
    %474 = vset.pattern.permute.xlu0 0
    %475 = vperm.xlu0 %474, %v472
    %v476 = vpop.permute.xlu0 %475
    %vm478 = vcmask 261120
    %v480 = vsel %vm478, %v471, 0
    %482 = vmatprep.subr.mxu0 0.0
    %483 = vmatpush1.msra.mxu0 %v467
    %484 = vmatprep.subr.mxu0 0.0
    %485 = vmatpush1.msra.mxu0 %v468
    %486 = vmatprep.subr.mxu0 0.0
    %487 = vmatpush1.msra.mxu0 %v469
    %488 = vmatprep.subr.mxu0 0.0
    %489 = vmatpush1.msra.mxu0 %v470
    %490 = vmatprep.subr.mxu0 0.0
    %491 = vmatpush1.msra.mxu0 0.0
    %492 = vmatprep.subr.mxu0 0.0
    %493 = vmatpush1.msra.mxu0 0.0
    %494 = vmatprep.subr.mxu0 0.0
    %495 = vmatpush1.msra.mxu0 0.0
    %496 = vmatprep.subr.mxu0 0.0
    %497 = vmatpush1.msra.mxu0 0.0
    %498 = vmatprep.subr.mxu0 0.0
    %499 = vmatpush1.msra.mxu0 0.0
    %500 = vmatprep.subr.mxu0 0.0
    %501 = vmatpush1.msra.mxu0 0.0
    %502 = vmatprep.subr.mxu0 0.0
    %503 = vmatpush1.msra.mxu0 0.0
    %504 = vmatprep.subr.mxu0 0.0
    %505 = vmatpush1.msra.mxu0 0.0
    %506 = vmatprep.subr.mxu0 0.0
    %507 = vmatpush1.msra.mxu0 0.0
    %508 = vmatprep.subr.mxu0 0.0
    %509 = vmatpush1.msra.mxu0 0.0
    %510 = vmatprep.subr.mxu0 0.0
    %511 = vmatpush1.msra.mxu0 0.0
    %512 = vmatprep.subr.mxu0 0.0
    %513 = vmatpush1.msra.mxu0 0.0
    %514 = vmatprep.subr.mxu0 0.0
    %515 = vmatpush1.msra.mxu0 0.0
    %516 = vmatprep.subr.mxu0 0.0
    %517 = vmatpush1.msra.mxu0 0.0
    %518 = vmatprep.subr.mxu0 0.0
    %519 = vmatpush1.msra.mxu0 0.0
    %520 = vmatprep.subr.mxu0 0.0
    %521 = vmatpush1.msra.mxu0 0.0
    %522 = vmatprep.subr.mxu0 0.0
    %523 = vmatpush1.msra.mxu0 0.0
    %524 = vmatprep.subr.mxu0 0.0
    %525 = vmatpush1.msra.mxu0 0.0
    %526 = vmatprep.subr.mxu0 0.0
    %527 = vmatpush1.msra.mxu0 0.0
    %528 = vmatprep.subr.mxu0 0.0
    %529 = vmatpush1.msra.mxu0 0.0
    %530 = vmatprep.subr.mxu0 0.0
    %531 = vmatpush1.msra.mxu0 0.0
    %532 = vmatprep.subr.mxu0 0.0
    %533 = vmatpush1.msra.mxu0 0.0
    %534 = vmatprep.subr.mxu0 0.0
    %535 = vmatpush1.msra.mxu0 0.0
    %536 = vmatprep.subr.mxu0 0.0
    %537 = vmatpush1.msra.mxu0 0.0
    %538 = vmatprep.subr.mxu0 0.0
    %539 = vmatpush1.msra.mxu0 0.0
    %540 = vmatprep.subr.mxu0 0.0
    %541 = vmatpush1.msra.mxu0 0.0
    %542 = vmatprep.subr.mxu0 0.0
    %543 = vmatpush1.msra.mxu0 0.0
    %544 = vmatprep.subr.mxu0 0.0
    %545 = vmatpush1.msra.mxu0 0.0
    %546 = vmatprep.mubr.f32.mxu0 0.0
    %547 = vmatmul.mubr.f32.gmra.mrb[0].mxu0 %v480
    %v548 = vpop.f32.mrb[0].mxu0
    %v549 = vadd.f32 %v476, %v548
    %v550 = vpop.f32.mrb[0].mxu0
    %551 = vdwg.mxu0
    %552 = vst [vmem:[#allocation2] sm:$0xff] %v549
    // Predicated region
    $region30: #{tpu_custom_call.1} parent=1 // pred_check
      _
    $region31: #{tpu_custom_call.1} parent=1 // pred_check_branch
      %554 = sbr.rel (0) target = $region33
    $region32: #{tpu_custom_call.1} parent=1 // pred_region
      %s556 = ssub.s32 128, 128
      %557 = vsyncadd [#allocation3], %s556
      %s559 = sshll.u32 [#allocation2], 4
      %s560 = int_to_ptr.vmem [resolvable:$true] %s559
      %562 = dma.vmem_to_hbm [thread:$0]  %s560, 128, %s7, [#allocation3]
    $region33: #{tpu_custom_call.1} parent=1 // pred_fallthru
      _
    // Predicated region
    $region34: #{tpu_custom_call.1} parent=1 // pred_check
      _
    $region35: #{tpu_custom_call.1} parent=1 // pred_check_branch
      %564 = sbr.rel (0) target = $region37
    $region36: #{tpu_custom_call.1} parent=1 // pred_region
      %565 = dma.done [#allocation3], 128
    $region37: #{tpu_custom_call.1} parent=1 // pred_fallthru
      _
    %566 = vsyncpa [#allocation3], 1

</llo_original>
